<compile_context>
chip_gen: v5e
topology: v5e:2x2
jax: 0.10.0
libtpu: 0.0.40
codegen_flags: <defaults>
</compile_context>

<pallas_src>
import math
import functools

import jax
import jax.numpy as jnp
from jax.experimental import pallas as pl
from jax.experimental.pallas import tpu as pltpu

_LANE = 128


def _vmem_capacity_bytes():
    """Physical VMEM size: hardware query, then device_kind heuristic."""
    try:
        info = pltpu.get_tpu_info()
        for name in ("vmem_capacity_bytes", "vmem_size_bytes", "vmem_bytes"):
            v = getattr(info, name, None)
            if isinstance(v, int) and v > 0:
                return v
    except Exception:
        pass
    try:
        kind = jax.devices()[0].device_kind.lower()
        if "v5" in kind or "v6" in kind:
            return 128 * 1024 * 1024          # v5e/v5p/v6e: 128 MiB per core
    except Exception:
        pass
    return 64 * 1024 * 1024                    # v7x / unknown: 64 MiB per core


def _row_multiple(dtype):
    # sublane packing: 8 rows/vreg at 32-bit, 16 at 16-bit, 32 at 8-bit
    return max(8, 32 // jnp.dtype(dtype).itemsize)


def _choose_block_rows(rows, width, dtype, vmem_limit_bytes, reserved_bytes=0):
    """Pick the row-block size.

    Priorities:
      * double-buffered in/out tiles + ~3 whole-tile f32 intermediates fit the
        scoped VMEM budget (minus VMEM-resident constants),
      * grid has >= ~8 steps (and always >= 2 when rows allow) so the BlockSpec
        pipeline overlaps DMA with compute and both v7x TensorCores are busy,
      * tiles stay >= ~1 MiB to amortize per-step overhead,
      * block rows are a multiple of the dtype's sublane-packing factor.
    """
    row_mult = _row_multiple(dtype)
    if rows <= 2 * row_mult:
        return rows                            # too small to split; full extent is legal

    itemsize = jnp.dtype(dtype).itemsize
    # double-buffered input + output tiles, plus ~3 whole-tile f32 temporaries
    per_row = width * (2 * itemsize + 2 * itemsize + 3 * 4)
    budget = max(int(vmem_limit_bytes * 0.5) - reserved_bytes, row_mult * per_row)
    br_vmem = budget // per_row

    br_pipe = max(rows // 8, row_mult)                    # aim for >= ~8 grid steps
    min_tile_rows = -(-(1 << 20) // (width * itemsize))   # tiles >= ~1 MiB
    br = min(br_vmem, max(br_pipe, min_tile_rows))

    br = max((br // row_mult) * row_mult, row_mult)
    # Never exceed half the rows: guarantees >= 2 grid steps, so DMA/compute
    # overlap exists and the v7x megacore split via "parallel" has work per core.
    half = max(((rows // 2) // row_mult) * row_mult, row_mult)
    return min(br, half)


def _rmsnorm_kernel(x_ref, scale_ref, *rest, d_x, eps, has_mask, has_offset):
    """Standard path: one (br, dim) tile, dim on lanes, reduce over lanes."""
    rest = list(rest)
    mask_ref = rest.pop(0) if has_mask else None
    offset_ref = rest.pop(0) if has_offset else None
    (o_ref,) = rest

    x = x_ref[...].astype(jnp.float32)                    # (br, dim)
    sq = x * x
    if mask_ref is not None:
        sq = sq * mask_ref[...]                           # (1, dim) 0/1 mask (hoisted)
    sumsq = jnp.sum(sq, axis=-1, keepdims=True)           # (br, 1)
    rms = jnp.sqrt(sumsq) * (float(d_x) ** -0.5)
    inv = pl.reciprocal(rms + eps, approx=False)          # exact; one divide per row
    y = (x * inv) * scale_ref[...].astype(jnp.float32)
    if offset_ref is not None:
        y = y + offset_ref[...].astype(jnp.float32)
    o_ref[...] = y.astype(o_ref.dtype)


def _rmsnorm_folded_kernel(x_ref, scale_ref, group_ref, *rest, d_x, eps,
                           has_mask, has_offset):
    """Lane-dense path for dim < 128: k rows folded into one (br, k*dim) tile.

    Per-original-row sum of squares via a precomputed block-diagonal matmul on
    the MXU (group_ref is a loop-invariant VMEM-resident constant).
    """
    rest = list(rest)
    mask_ref = rest.pop(0) if has_mask else None
    offset_ref = rest.pop(0) if has_offset else None
    (o_ref,) = rest

    x = x_ref[...].astype(jnp.float32)                    # (br, w)
    sq = x * x
    if mask_ref is not None:
        sq = sq * mask_ref[...]                           # (1, w) 0/1 mask (hoisted)
    # per-group sum of squares, broadcast back across each group's lanes
    sumsq = jnp.dot(sq, group_ref[...], preferred_element_type=jnp.float32)
    rms = jnp.sqrt(sumsq) * (float(d_x) ** -0.5)
    inv = pl.reciprocal(rms + eps, approx=False)
    y = (x * inv) * scale_ref[...].astype(jnp.float32)
    if offset_ref is not None:
        y = y + offset_ref[...].astype(jnp.float32)
    o_ref[...] = y.astype(o_ref.dtype)


def rms_norm(x, scale, offset=None, *, p=-1.0, eps=1e-8, block_rows=None):
    """Pallas RMSNorm matching the PyTorch module's forward semantics."""
    dim = x.shape[-1]
    assert scale.shape == (dim,)
    if offset is not None:
        assert offset.shape == (dim,)

    lead_shape = x.shape[:-1]
    rows = math.prod(lead_shape) if lead_shape else 1

    if p < 0.0 or p > 1.0:
        partial_size = None
        d_x = dim
    else:
        partial_size = int(dim * p)
        d_x = partial_size
        if partial_size >= dim:                # p == 1.0 -> same as full norm
            partial_size = None
            d_x = dim
        elif partial_size == 0:
            # PyTorch would raise ZeroDivisionError at d_x ** (-1/2); fail loudly.
            raise ValueError("partial RMSNorm with int(dim * p) == 0 is undefined")

    x2 = x.reshape(rows, dim)

    # Lane-dense folding for small dims: present a (rows/k, k*dim) view so
    # stores are unmasked full-width vst. Prefer wider folds (512 > 256 > 128
    # lanes): wider stores, fewer grid rows/reciprocals, and the group matmul
    # covers the native 256-wide MXU on v6e/v7x. Capped at 512 so the f32
    # matmul stays below the HBM roofline on all generations and the resident
    # block-diagonal constant stays <= 1 MiB.
    fold = 1
    if dim < _LANE and _LANE % dim == 0:
        for target_width in (512, 256, _LANE):
            k = target_width // dim
            if k > 1 and rows % k == 0:
                fold = k
                break
    use_folded = fold > 1

    width = dim * fold
    rows_f = rows // fold
    if use_folded:
        x2 = x2.reshape(rows_f, width)
        scale2 = jnp.tile(scale.reshape(1, dim), (1, fold))
        offset2 = None if offset is None else jnp.tile(offset.reshape(1, dim), (1, fold))
    else:
        scale2 = scale.reshape(1, dim)
        offset2 = None if offset is None else offset.reshape(1, dim)

    # Hoist loop-invariant constants: the kernel grid is a sequential loop, so
    # anything built inside the body would be regenerated every step.
    mask2 = None
    if partial_size is not None:
        base_mask = (jnp.arange(dim) < partial_size).astype(jnp.float32)
        mask2 = jnp.tile(base_mask.reshape(1, dim), (1, fold))
    group = None
    if use_folded:
        gi = jnp.arange(width)[:, None] // dim
        gj = jnp.arange(width)[None, :] // dim
        group = (gi == gj).astype(jnp.float32)             # block-diagonal (w, w)

    # Scoped VMEM budget: half the physical capacity, capped at 64 MiB
    # (=> 64 MiB on v5e/v6e's 128 MiB, 32 MiB on v7x's 64 MiB).
    vmem_limit = int(min(_vmem_capacity_bytes() // 2, 64 * 1024 * 1024))

    # VMEM reserved by resident constants (double-buffered spec buffers).
    reserved = 2 * width * 4 * (2 + (1 if mask2 is not None else 0))
    if group is not None:
        reserved += 2 * width * width * 4

    row_mult = _row_multiple(x.dtype)
    if block_rows is None:
        br = _choose_block_rows(rows_f, width, x.dtype, vmem_limit, reserved)
    else:
        br = max(1, min(int(block_rows), rows_f))
        if br < rows_f:
            br = max((br // row_mult) * row_mult, min(row_mult, rows_f))

    grid = (pl.cdiv(rows_f, br),)
    row_spec = pl.BlockSpec((br, width), lambda i: (i, 0))
    vec_spec = pl.BlockSpec((1, width), lambda i: (0, 0))

    args = [x2, scale2]
    in_specs = [row_spec, vec_spec]
    if use_folded:
        args.append(group)
        in_specs.append(pl.BlockSpec((width, width), lambda i: (0, 0)))
    if mask2 is not None:
        args.append(mask2)
        in_specs.append(vec_spec)
    if offset2 is not None:
        args.append(offset2)
        in_specs.append(vec_spec)

    kernel_fn = _rmsnorm_folded_kernel if use_folded else _rmsnorm_kernel
    kernel = functools.partial(kernel_fn, d_x=d_x, eps=eps,
                               has_mask=mask2 is not None,
                               has_offset=offset2 is not None)

    # NOTE: tail blocks (rows_f % br != 0) read padded/garbage rows; this is
    # safe because all math here is strictly row-local.
    out = pl.pallas_call(
        kernel,
        out_shape=jax.ShapeDtypeStruct((rows_f, width), x.dtype),
        grid=grid,
        in_specs=in_specs,
        out_specs=row_spec,
        compiler_params=pltpu.CompilerParams(
            dimension_semantics=("parallel",),
            vmem_limit_bytes=vmem_limit),
    )(*args)
    return out.reshape(x.shape)


def rms_norm_ref(x, scale, offset=None, *, p=-1.0, eps=1e-8):
    """Pure-JAX reference mirroring the PyTorch forward exactly."""
    dim = x.shape[-1]
    if p < 0.0 or p > 1.0:
        norm_x = jnp.linalg.norm(x, axis=-1, keepdims=True)
        d_x = dim
    else:
        partial_size = int(dim * p)
        norm_x = jnp.linalg.norm(x[..., :partial_size], axis=-1, keepdims=True)
        d_x = partial_size
    rms_x = norm_x * (float(d_x) ** -0.5)
    x_normed = x / (rms_x + eps)
    if offset is not None:
        return scale * x_normed + offset
    return scale * x_normed


if __name__ == "__main__":
    key = jax.random.PRNGKey(0)
    k1, k2, k3, k4 = jax.random.split(key, 4)

    # Case 1: RMSNorm(dim=32), p=-1 (full), no bias -> lane-dense folded path.
    batch, seq, dim = 2, 8, 32
    x = jax.random.normal(k1, (batch, seq, dim), dtype=jnp.float32)
    scale = jnp.ones((dim,), dtype=jnp.float32)          # torch.ones(dim)
    out = jax.block_until_ready(rms_norm(x, scale, p=-1.0, eps=1e-8))
    ref = rms_norm_ref(x, scale, p=-1.0, eps=1e-8)
    assert out.shape == x.shape and out.dtype == x.dtype
    assert jnp.allclose(out, ref, atol=1e-5, rtol=1e-5)

    # Case 2: dim=256, partial RMSNorm (p=0.3 -> 76 features), with bias ->
    # standard path + hoisted lane mask + offset.
    dim2 = 256
    x2 = jax.random.normal(k2, (batch, seq, dim2), dtype=jnp.float32)
    scale2 = jax.random.normal(k3, (dim2,), dtype=jnp.float32)
    offset2 = jax.random.normal(k4, (dim2,), dtype=jnp.float32) * 0.1
    out2 = jax.block_until_ready(rms_norm(x2, scale2, offset2, p=0.3, eps=1e-8))
    ref2 = rms_norm_ref(x2, scale2, offset2, p=0.3, eps=1e-8)
    assert jnp.allclose(out2, ref2, atol=1e-5, rtol=1e-5)

    # Case 3: bf16 input, full norm, no bias (16-row sublane-packing path).
    x3 = jax.random.normal(k2, (batch, seq, dim2), dtype=jnp.float32)
    out3 = jax.block_until_ready(
        rms_norm(x3.astype(jnp.bfloat16), scale2.astype(jnp.bfloat16)))
    ref3 = rms_norm_ref(x3, scale2)
    assert out3.dtype == jnp.bfloat16
    assert jnp.allclose(out3.astype(jnp.float32), ref3, atol=2e-2, rtol=2e-2)

    # Case 4: enough rows to exercise a multi-step grid (pipelined blocks).
    dim4 = 512
    x4 = jax.random.normal(k3, (4, 64, dim4), dtype=jnp.float32)
    scale4 = jax.random.normal(k4, (dim4,), dtype=jnp.float32)
    out4 = jax.block_until_ready(rms_norm(x4, scale4))
    ref4 = rms_norm_ref(x4, scale4)
    assert jnp.allclose(out4, ref4, atol=1e-5, rtol=1e-5)

    print("KERNEL_OK")
</pallas_src>

<mosaic_0001>
module attributes {stable_mosaic.version = 11 : i64} {
  func.func @_rmsnorm_folded_kernel(%arg0: i32, %arg1: memref<1x512xf32, #tpu.memory_space<vmem>>, %arg2: memref<1x512xf32, #tpu.memory_space<vmem>>, %arg3: memref<512x512xf32, #tpu.memory_space<vmem>>, %arg4: memref<1x512xf32, #tpu.memory_space<vmem>>) attributes {dimension_semantics = [#tpu.dimension_semantics<parallel>], iteration_bounds = array<i64: 1>, scalar_prefetch = 0 : i64, scratch_operands = 0 : i64, tpu.core_type = #tpu.core_type<tc>, window_params = [{transform_indices = @transform_0, window_bounds = array<i64: 1, 512>}, {pipeline_mode = #tpu.pipeline_mode<synchronous>, transform_indices = @transform_1, window_bounds = array<i64: 1, 512>}, {pipeline_mode = #tpu.pipeline_mode<synchronous>, transform_indices = @transform_2, window_bounds = array<i64: 512, 512>}, {transform_indices = @transform_3, window_bounds = array<i64: 1, 512>}]} {
    %c0 = arith.constant 0 : index
    %c0_0 = arith.constant 0 : index
    %0 = vector.load %arg1[%c0, %c0_0] : memref<1x512xf32, #tpu.memory_space<vmem>>, vector<1x512xf32>
    %1 = arith.mulf %0, %0 : vector<1x512xf32>
    %c0_1 = arith.constant 0 : index
    %c0_2 = arith.constant 0 : index
    %2 = vector.load %arg3[%c0_1, %c0_2] : memref<512x512xf32, #tpu.memory_space<vmem>>, vector<512x512xf32>
    %cst = arith.constant dense<0.000000e+00> : vector<1x512xf32>
    %3 = tpu.matmul %1, %2, %cst {dimension_numbers = #tpu.dot_dimension_numbers<[1], [0], [0], [1], [0, 0, 1, 1], [], []>} : vector<1x512xf32>, vector<512x512xf32>, vector<1x512xf32> -> vector<1x512xf32>
    %4 = math.sqrt %3 : vector<1x512xf32>
    %cst_3 = arith.constant 0.176776692 : f32
    %5 = vector.broadcast %cst_3 : f32 to vector<1x512xf32>
    %6 = arith.mulf %4, %5 : vector<1x512xf32>
    %cst_4 = arith.constant 9.99999993E-9 : f32
    %7 = vector.broadcast %cst_4 : f32 to vector<1x512xf32>
    %8 = arith.addf %6, %7 : vector<1x512xf32>
    %9 = tpu.reciprocal %8 : vector<1x512xf32> -> vector<1x512xf32>
    %10 = arith.mulf %0, %9 : vector<1x512xf32>
    %c0_5 = arith.constant 0 : index
    %c0_6 = arith.constant 0 : index
    %11 = vector.load %arg2[%c0_5, %c0_6] : memref<1x512xf32, #tpu.memory_space<vmem>>, vector<1x512xf32>
    %12 = arith.mulf %10, %11 : vector<1x512xf32>
    %c0_7 = arith.constant 0 : index
    %c0_8 = arith.constant 0 : index
    %13 = vector.load %arg4[%c0_7, %c0_8] : memref<1x512xf32, #tpu.memory_space<vmem>>, vector<1x512xf32>
    tpu.vector_store %arg4[%c0_7, %c0_8], %12 {strides = array<i32>} : memref<1x512xf32, #tpu.memory_space<vmem>>, vector<1x512xf32>,
    return
  }
  func.func @transform_0(%arg0: i32) -> (i32, i32) {
    %c0_i32 = arith.constant 0 : i32
    %c0_i32_0 = arith.constant 0 : i32
    return %arg0, %c0_i32 : i32, i32
  }
  func.func @transform_1(%arg0: i32) -> (i32, i32) {
    %c0_i32 = arith.constant 0 : i32
    %c0_i32_0 = arith.constant 0 : i32
    %c0_i32_1 = arith.constant 0 : i32
    return %c0_i32, %c0_i32_0 : i32, i32
  }
  func.func @transform_2(%arg0: i32) -> (i32, i32) {
    %c0_i32 = arith.constant 0 : i32
    %c0_i32_0 = arith.constant 0 : i32
    %c0_i32_1 = arith.constant 0 : i32
    return %c0_i32, %c0_i32_0 : i32, i32
  }
  func.func @transform_3(%arg0: i32) -> (i32, i32) {
    %c0_i32 = arith.constant 0 : i32
    %c0_i32_0 = arith.constant 0 : i32
    return %arg0, %c0_i32 : i32, i32
  }
}

</mosaic_0001>

<llo_original>
// kernel: tpu_custom_call.1
$region0: #{tpu_custom_call.1}
  #allocation0 [shape = 'u32[]', space=smem, size = 0x4, offset = 0x4, fixed_abs, tag = 'smem constant byte address 0x4 - core index']
  #allocation1 [shape = 'u32[72,128]{1,0:T(1,128)}', space=vmem, size = 0x9000, scoped, tag = 'internal scratch']
  %s0 = inlined_call_operand.hbm [shape: f32[1,512], index: 0, kind: input, shape index: {}]
  %s1 = inlined_call_operand.hbm [shape: f32[1,512], index: 1, kind: input, shape index: {}]
  %s2 = inlined_call_operand.hbm [shape: f32[512,512], index: 2, kind: input, shape index: {}]
  %s3 = inlined_call_operand.hbm [shape: f32[1,512], index: 3, kind: output, shape index: {}]
  %s4 = sld [smem:[#allocation0]]
  $region34: #{tpu_custom_call.1} parent=0
    _
  %s6 = ssub.s32 1, %s4
  %s7 = scalar_select 0, %s6, %s4
  $region1: #{tpu_custom_call.1} parent=0
    #allocation2 [shape = 'u8[2048]{0}', space=vmem, size = 0x800, scoped, tag = 'input window, operand 0, single buffered']
    #allocation3 [shape = 's32[1]{0}', space=sflag, size = 0x4, scoped, tag = 'scoped memory for tpu_custom_call.1']
    #allocation4 [shape = 's32[1]{0}', space=sflag, size = 0x4, scoped, tag = 'scoped memory for tpu_custom_call.1']
    #allocation5 [shape = 'u8[2048]{0}', space=vmem, size = 0x800, scoped, tag = 'input window, operand 1, single buffered']
    #allocation6 [shape = 's32[1]{0}', space=sflag, size = 0x4, scoped, tag = 'scoped memory for tpu_custom_call.1']
    #allocation7 [shape = 'u8[1048576]{0}', space=vmem, size = 0x100000, scoped, tag = 'input window, operand 2, single buffered']
    #allocation8 [shape = 'u8[2048]{0}', space=vmem, size = 0x800, scoped, tag = 'output window, operand 0, single buffered']
    %8 = vsyncpa [#allocation3], 0
    %9 = vsyncpa [#allocation6], 0
    %10 = vsyncpa [#allocation4], 0
    // Predicated region
    $region2: #{tpu_custom_call.1} parent=1 // pred_check
      _
    $region3: #{tpu_custom_call.1} parent=1 // pred_check_branch
      %12 = sbr.rel (0) target = $region5
    $region4: #{tpu_custom_call.1} parent=1 // pred_region
      %14 = vsyncadd [#allocation3], 0
      %s16 = sshll.u32 %s0, 4
      %s17 = int_to_ptr.hbm [resolvable:$true] %s16
      %s18 = sshll.u32 [#allocation2], 4
      %s19 = int_to_ptr.vmem [resolvable:$true] %s18
      %21 = dma.hbm_to_vmem [thread:$0]  %s17, 64, %s19, [#allocation3]
    $region5: #{tpu_custom_call.1} parent=1 // pred_fallthru
      _
    // Predicated region
    $region6: #{tpu_custom_call.1} parent=1 // pred_check
      _
    $region7: #{tpu_custom_call.1} parent=1 // pred_check_branch
      %23 = sbr.rel (0) target = $region9
    $region8: #{tpu_custom_call.1} parent=1 // pred_region
      %25 = vsyncadd [#allocation6], 0
      %s27 = sshll.u32 %s1, 4
      %s28 = int_to_ptr.hbm [resolvable:$true] %s27
      %s29 = sshll.u32 [#allocation5], 4
      %s30 = int_to_ptr.vmem [resolvable:$true] %s29
      %32 = dma.hbm_to_vmem [thread:$0]  %s28, 64, %s30, [#allocation6]
    $region9: #{tpu_custom_call.1} parent=1 // pred_fallthru
      _
    // Predicated region
    $region10: #{tpu_custom_call.1} parent=1 // pred_check
      _
    $region11: #{tpu_custom_call.1} parent=1 // pred_check_branch
      %34 = sbr.rel (0) target = $region13
    $region12: #{tpu_custom_call.1} parent=1 // pred_region
      %36 = vsyncadd [#allocation6], 0
      %s37 = sshll.u32 %s2, 4
      %s38 = int_to_ptr.hbm [resolvable:$true] %s37
      %s39 = sshll.u32 [#allocation7], 4
      %s40 = int_to_ptr.vmem [resolvable:$true] %s39
      %45 = dma.hbm_to_vmem [thread:$0]  %s38, 32768, %s40, [#allocation6], 512, 512, 32
    $region13: #{tpu_custom_call.1} parent=1 // pred_fallthru
      _
    // Predicated region
    $region14: #{tpu_custom_call.1} parent=1 // pred_check
      _
    $region15: #{tpu_custom_call.1} parent=1 // pred_check_branch
      %47 = sbr.rel (0) target = $region17
    $region16: #{tpu_custom_call.1} parent=1 // pred_region
      %49 = dma.done [#allocation3], 64
    $region17: #{tpu_custom_call.1} parent=1 // pred_fallthru
      _
    // Predicated region
    $region18: #{tpu_custom_call.1} parent=1 // pred_check
      _
    $region19: #{tpu_custom_call.1} parent=1 // pred_check_branch
      %51 = sbr.rel (0) target = $region21
    $region20: #{tpu_custom_call.1} parent=1 // pred_region
      %53 = dma.done [#allocation6], 64
    $region21: #{tpu_custom_call.1} parent=1 // pred_fallthru
      _
    // Predicated region
    $region22: #{tpu_custom_call.1} parent=1 // pred_check
      _
    $region23: #{tpu_custom_call.1} parent=1 // pred_check_branch
      %55 = sbr.rel (0) target = $region25
    $region24: #{tpu_custom_call.1} parent=1 // pred_region
      %57 = dma.done [#allocation6], 32768
    $region25: #{tpu_custom_call.1} parent=1 // pred_fallthru
      _
    %v58 = vld [vmem:[#allocation2] sm:$0xf]
    %v59 = vmul.f32 %v58, %v58
    %v60 = vld [vmem:[#allocation7] sm:$0xff]
    %v61 = vld [vmem:[#allocation7 + $0x8] sm:$0xff]
    %v62 = vld [vmem:[#allocation7 + $0x10] sm:$0xff]
    %v63 = vld [vmem:[#allocation7 + $0x18] sm:$0xff]
    %v64 = vld [vmem:[#allocation7 + $0x20] sm:$0xff]
    %v65 = vld [vmem:[#allocation7 + $0x28] sm:$0xff]
    %v66 = vld [vmem:[#allocation7 + $0x30] sm:$0xff]
    %v67 = vld [vmem:[#allocation7 + $0x38] sm:$0xff]
    %v68 = vld [vmem:[#allocation7 + $0x40] sm:$0xff]
    %v69 = vld [vmem:[#allocation7 + $0x48] sm:$0xff]
    %v70 = vld [vmem:[#allocation7 + $0x50] sm:$0xff]
    %v71 = vld [vmem:[#allocation7 + $0x58] sm:$0xff]
    %v72 = vld [vmem:[#allocation7 + $0x60] sm:$0xff]
    %v73 = vld [vmem:[#allocation7 + $0x68] sm:$0xff]
    %v74 = vld [vmem:[#allocation7 + $0x70] sm:$0xff]
    %v75 = vld [vmem:[#allocation7 + $0x78] sm:$0xff]
    %v76 = vld [vmem:[#allocation7 + $0x80] sm:$0xff]
    %v77 = vld [vmem:[#allocation7 + $0x88] sm:$0xff]
    %v78 = vld [vmem:[#allocation7 + $0x90] sm:$0xff]
    %v79 = vld [vmem:[#allocation7 + $0x98] sm:$0xff]
    %v80 = vld [vmem:[#allocation7 + $0xa0] sm:$0xff]
    %v81 = vld [vmem:[#allocation7 + $0xa8] sm:$0xff]
    %v82 = vld [vmem:[#allocation7 + $0xb0] sm:$0xff]
    %v83 = vld [vmem:[#allocation7 + $0xb8] sm:$0xff]
    %v84 = vld [vmem:[#allocation7 + $0xc0] sm:$0xff]
    %v85 = vld [vmem:[#allocation7 + $0xc8] sm:$0xff]
    %v86 = vld [vmem:[#allocation7 + $0xd0] sm:$0xff]
    %v87 = vld [vmem:[#allocation7 + $0xd8] sm:$0xff]
    %v88 = vld [vmem:[#allocation7 + $0xe0] sm:$0xff]
    %v89 = vld [vmem:[#allocation7 + $0xe8] sm:$0xff]
    %v90 = vld [vmem:[#allocation7 + $0xf0] sm:$0xff]
    %v91 = vld [vmem:[#allocation7 + $0xf8] sm:$0xff]
    %v92 = vld [vmem:[#allocation7 + $0x100] sm:$0xff]
    %v93 = vld [vmem:[#allocation7 + $0x108] sm:$0xff]
    %v94 = vld [vmem:[#allocation7 + $0x110] sm:$0xff]
    %v95 = vld [vmem:[#allocation7 + $0x118] sm:$0xff]
    %v96 = vld [vmem:[#allocation7 + $0x120] sm:$0xff]
    %v97 = vld [vmem:[#allocation7 + $0x128] sm:$0xff]
    %v98 = vld [vmem:[#allocation7 + $0x130] sm:$0xff]
    %v99 = vld [vmem:[#allocation7 + $0x138] sm:$0xff]
    %v100 = vld [vmem:[#allocation7 + $0x140] sm:$0xff]
    %v101 = vld [vmem:[#allocation7 + $0x148] sm:$0xff]
    %v102 = vld [vmem:[#allocation7 + $0x150] sm:$0xff]
    %v103 = vld [vmem:[#allocation7 + $0x158] sm:$0xff]
    %v104 = vld [vmem:[#allocation7 + $0x160] sm:$0xff]
    %v105 = vld [vmem:[#allocation7 + $0x168] sm:$0xff]
    %v106 = vld [vmem:[#allocation7 + $0x170] sm:$0xff]
    %v107 = vld [vmem:[#allocation7 + $0x178] sm:$0xff]
    %v108 = vld [vmem:[#allocation7 + $0x180] sm:$0xff]
    %v109 = vld [vmem:[#allocation7 + $0x188] sm:$0xff]
    %v110 = vld [vmem:[#allocation7 + $0x190] sm:$0xff]
    %v111 = vld [vmem:[#allocation7 + $0x198] sm:$0xff]
    %v112 = vld [vmem:[#allocation7 + $0x1a0] sm:$0xff]
    %v113 = vld [vmem:[#allocation7 + $0x1a8] sm:$0xff]
    %v114 = vld [vmem:[#allocation7 + $0x1b0] sm:$0xff]
    %v115 = vld [vmem:[#allocation7 + $0x1b8] sm:$0xff]
    %v116 = vld [vmem:[#allocation7 + $0x1c0] sm:$0xff]
    %v117 = vld [vmem:[#allocation7 + $0x1c8] sm:$0xff]
    %v118 = vld [vmem:[#allocation7 + $0x1d0] sm:$0xff]
    %v119 = vld [vmem:[#allocation7 + $0x1d8] sm:$0xff]
    %v120 = vld [vmem:[#allocation7 + $0x1e0] sm:$0xff]
    %v121 = vld [vmem:[#allocation7 + $0x1e8] sm:$0xff]
    %v122 = vld [vmem:[#allocation7 + $0x1f0] sm:$0xff]
    %v123 = vld [vmem:[#allocation7 + $0x1f8] sm:$0xff]
    %v124 = vld [vmem:[#allocation7 + $0x200] sm:$0xff]
    %v125 = vld [vmem:[#allocation7 + $0x208] sm:$0xff]
    %v126 = vld [vmem:[#allocation7 + $0x210] sm:$0xff]
    %v127 = vld [vmem:[#allocation7 + $0x218] sm:$0xff]
    %v128 = vld [vmem:[#allocation7 + $0x220] sm:$0xff]
    %v129 = vld [vmem:[#allocation7 + $0x228] sm:$0xff]
    %v130 = vld [vmem:[#allocation7 + $0x230] sm:$0xff]
    %v131 = vld [vmem:[#allocation7 + $0x238] sm:$0xff]
    %v132 = vld [vmem:[#allocation7 + $0x240] sm:$0xff]
    %v133 = vld [vmem:[#allocation7 + $0x248] sm:$0xff]
    %v134 = vld [vmem:[#allocation7 + $0x250] sm:$0xff]
    %v135 = vld [vmem:[#allocation7 + $0x258] sm:$0xff]
    %v136 = vld [vmem:[#allocation7 + $0x260] sm:$0xff]
    %v137 = vld [vmem:[#allocation7 + $0x268] sm:$0xff]
    %v138 = vld [vmem:[#allocation7 + $0x270] sm:$0xff]
    %v139 = vld [vmem:[#allocation7 + $0x278] sm:$0xff]
    %v140 = vld [vmem:[#allocation7 + $0x280] sm:$0xff]
    %v141 = vld [vmem:[#allocation7 + $0x288] sm:$0xff]
    %v142 = vld [vmem:[#allocation7 + $0x290] sm:$0xff]
    %v143 = vld [vmem:[#allocation7 + $0x298] sm:$0xff]
    %v144 = vld [vmem:[#allocation7 + $0x2a0] sm:$0xff]
    %v145 = vld [vmem:[#allocation7 + $0x2a8] sm:$0xff]
    %v146 = vld [vmem:[#allocation7 + $0x2b0] sm:$0xff]
    %v147 = vld [vmem:[#allocation7 + $0x2b8] sm:$0xff]
    %v148 = vld [vmem:[#allocation7 + $0x2c0] sm:$0xff]
    %v149 = vld [vmem:[#allocation7 + $0x2c8] sm:$0xff]
    %v150 = vld [vmem:[#allocation7 + $0x2d0] sm:$0xff]
    %v151 = vld [vmem:[#allocation7 + $0x2d8] sm:$0xff]
    %v152 = vld [vmem:[#allocation7 + $0x2e0] sm:$0xff]
    %v153 = vld [vmem:[#allocation7 + $0x2e8] sm:$0xff]
    %v154 = vld [vmem:[#allocation7 + $0x2f0] sm:$0xff]
    %v155 = vld [vmem:[#allocation7 + $0x2f8] sm:$0xff]
    %v156 = vld [vmem:[#allocation7 + $0x300] sm:$0xff]
    %v157 = vld [vmem:[#allocation7 + $0x308] sm:$0xff]
    %v158 = vld [vmem:[#allocation7 + $0x310] sm:$0xff]
    %v159 = vld [vmem:[#allocation7 + $0x318] sm:$0xff]
    %v160 = vld [vmem:[#allocation7 + $0x320] sm:$0xff]
    %v161 = vld [vmem:[#allocation7 + $0x328] sm:$0xff]
    %v162 = vld [vmem:[#allocation7 + $0x330] sm:$0xff]
    %v163 = vld [vmem:[#allocation7 + $0x338] sm:$0xff]
    %v164 = vld [vmem:[#allocation7 + $0x340] sm:$0xff]
    %v165 = vld [vmem:[#allocation7 + $0x348] sm:$0xff]
    %v166 = vld [vmem:[#allocation7 + $0x350] sm:$0xff]
    %v167 = vld [vmem:[#allocation7 + $0x358] sm:$0xff]
    %v168 = vld [vmem:[#allocation7 + $0x360] sm:$0xff]
    %v169 = vld [vmem:[#allocation7 + $0x368] sm:$0xff]
    %v170 = vld [vmem:[#allocation7 + $0x370] sm:$0xff]
    %v171 = vld [vmem:[#allocation7 + $0x378] sm:$0xff]
    %v172 = vld [vmem:[#allocation7 + $0x380] sm:$0xff]
    %v173 = vld [vmem:[#allocation7 + $0x388] sm:$0xff]
    %v174 = vld [vmem:[#allocation7 + $0x390] sm:$0xff]
    %v175 = vld [vmem:[#allocation7 + $0x398] sm:$0xff]
    %v176 = vld [vmem:[#allocation7 + $0x3a0] sm:$0xff]
    %v177 = vld [vmem:[#allocation7 + $0x3a8] sm:$0xff]
    %v178 = vld [vmem:[#allocation7 + $0x3b0] sm:$0xff]
    %v179 = vld [vmem:[#allocation7 + $0x3b8] sm:$0xff]
    %v180 = vld [vmem:[#allocation7 + $0x3c0] sm:$0xff]
    %v181 = vld [vmem:[#allocation7 + $0x3c8] sm:$0xff]
    %v182 = vld [vmem:[#allocation7 + $0x3d0] sm:$0xff]
    %v183 = vld [vmem:[#allocation7 + $0x3d8] sm:$0xff]
    %v184 = vld [vmem:[#allocation7 + $0x3e0] sm:$0xff]
    %v185 = vld [vmem:[#allocation7 + $0x3e8] sm:$0xff]
    %v186 = vld [vmem:[#allocation7 + $0x3f0] sm:$0xff]
    %v187 = vld [vmem:[#allocation7 + $0x3f8] sm:$0xff]
    %v188 = vld [vmem:[#allocation7 + $0x400] sm:$0xff]
    %v189 = vld [vmem:[#allocation7 + $0x408] sm:$0xff]
    %v190 = vld [vmem:[#allocation7 + $0x410] sm:$0xff]
    %v191 = vld [vmem:[#allocation7 + $0x418] sm:$0xff]
    %v192 = vld [vmem:[#allocation7 + $0x420] sm:$0xff]
    %v193 = vld [vmem:[#allocation7 + $0x428] sm:$0xff]
    %v194 = vld [vmem:[#allocation7 + $0x430] sm:$0xff]
    %v195 = vld [vmem:[#allocation7 + $0x438] sm:$0xff]
    %v196 = vld [vmem:[#allocation7 + $0x440] sm:$0xff]
    %v197 = vld [vmem:[#allocation7 + $0x448] sm:$0xff]
    %v198 = vld [vmem:[#allocation7 + $0x450] sm:$0xff]
    %v199 = vld [vmem:[#allocation7 + $0x458] sm:$0xff]
    %v200 = vld [vmem:[#allocation7 + $0x460] sm:$0xff]
    %v201 = vld [vmem:[#allocation7 + $0x468] sm:$0xff]
    %v202 = vld [vmem:[#allocation7 + $0x470] sm:$0xff]
    %v203 = vld [vmem:[#allocation7 + $0x478] sm:$0xff]
    %v204 = vld [vmem:[#allocation7 + $0x480] sm:$0xff]
    %v205 = vld [vmem:[#allocation7 + $0x488] sm:$0xff]
    %v206 = vld [vmem:[#allocation7 + $0x490] sm:$0xff]
    %v207 = vld [vmem:[#allocation7 + $0x498] sm:$0xff]
    %v208 = vld [vmem:[#allocation7 + $0x4a0] sm:$0xff]
    %v209 = vld [vmem:[#allocation7 + $0x4a8] sm:$0xff]
    %v210 = vld [vmem:[#allocation7 + $0x4b0] sm:$0xff]
    %v211 = vld [vmem:[#allocation7 + $0x4b8] sm:$0xff]
    %v212 = vld [vmem:[#allocation7 + $0x4c0] sm:$0xff]
    %v213 = vld [vmem:[#allocation7 + $0x4c8] sm:$0xff]
    %v214 = vld [vmem:[#allocation7 + $0x4d0] sm:$0xff]
    %v215 = vld [vmem:[#allocation7 + $0x4d8] sm:$0xff]
    %v216 = vld [vmem:[#allocation7 + $0x4e0] sm:$0xff]
    %v217 = vld [vmem:[#allocation7 + $0x4e8] sm:$0xff]
    %v218 = vld [vmem:[#allocation7 + $0x4f0] sm:$0xff]
    %v219 = vld [vmem:[#allocation7 + $0x4f8] sm:$0xff]
    %v220 = vld [vmem:[#allocation7 + $0x500] sm:$0xff]
    %v221 = vld [vmem:[#allocation7 + $0x508] sm:$0xff]
    %v222 = vld [vmem:[#allocation7 + $0x510] sm:$0xff]
    %v223 = vld [vmem:[#allocation7 + $0x518] sm:$0xff]
    %v224 = vld [vmem:[#allocation7 + $0x520] sm:$0xff]
    %v225 = vld [vmem:[#allocation7 + $0x528] sm:$0xff]
    %v226 = vld [vmem:[#allocation7 + $0x530] sm:$0xff]
    %v227 = vld [vmem:[#allocation7 + $0x538] sm:$0xff]
    %v228 = vld [vmem:[#allocation7 + $0x540] sm:$0xff]
    %v229 = vld [vmem:[#allocation7 + $0x548] sm:$0xff]
    %v230 = vld [vmem:[#allocation7 + $0x550] sm:$0xff]
    %v231 = vld [vmem:[#allocation7 + $0x558] sm:$0xff]
    %v232 = vld [vmem:[#allocation7 + $0x560] sm:$0xff]
    %v233 = vld [vmem:[#allocation7 + $0x568] sm:$0xff]
    %v234 = vld [vmem:[#allocation7 + $0x570] sm:$0xff]
    %v235 = vld [vmem:[#allocation7 + $0x578] sm:$0xff]
    %v236 = vld [vmem:[#allocation7 + $0x580] sm:$0xff]
    %v237 = vld [vmem:[#allocation7 + $0x588] sm:$0xff]
    %v238 = vld [vmem:[#allocation7 + $0x590] sm:$0xff]
    %v239 = vld [vmem:[#allocation7 + $0x598] sm:$0xff]
    %v240 = vld [vmem:[#allocation7 + $0x5a0] sm:$0xff]
    %v241 = vld [vmem:[#allocation7 + $0x5a8] sm:$0xff]
    %v242 = vld [vmem:[#allocation7 + $0x5b0] sm:$0xff]
    %v243 = vld [vmem:[#allocation7 + $0x5b8] sm:$0xff]
    %v244 = vld [vmem:[#allocation7 + $0x5c0] sm:$0xff]
    %v245 = vld [vmem:[#allocation7 + $0x5c8] sm:$0xff]
    %v246 = vld [vmem:[#allocation7 + $0x5d0] sm:$0xff]
    %v247 = vld [vmem:[#allocation7 + $0x5d8] sm:$0xff]
    %v248 = vld [vmem:[#allocation7 + $0x5e0] sm:$0xff]
    %v249 = vld [vmem:[#allocation7 + $0x5e8] sm:$0xff]
    %v250 = vld [vmem:[#allocation7 + $0x5f0] sm:$0xff]
    %v251 = vld [vmem:[#allocation7 + $0x5f8] sm:$0xff]
    %v252 = vld [vmem:[#allocation7 + $0x600] sm:$0xff]
    %v253 = vld [vmem:[#allocation7 + $0x608] sm:$0xff]
    %v254 = vld [vmem:[#allocation7 + $0x610] sm:$0xff]
    %v255 = vld [vmem:[#allocation7 + $0x618] sm:$0xff]
    %v256 = vld [vmem:[#allocation7 + $0x620] sm:$0xff]
    %v257 = vld [vmem:[#allocation7 + $0x628] sm:$0xff]
    %v258 = vld [vmem:[#allocation7 + $0x630] sm:$0xff]
    %v259 = vld [vmem:[#allocation7 + $0x638] sm:$0xff]
    %v260 = vld [vmem:[#allocation7 + $0x640] sm:$0xff]
    %v261 = vld [vmem:[#allocation7 + $0x648] sm:$0xff]
    %v262 = vld [vmem:[#allocation7 + $0x650] sm:$0xff]
    %v263 = vld [vmem:[#allocation7 + $0x658] sm:$0xff]
    %v264 = vld [vmem:[#allocation7 + $0x660] sm:$0xff]
    %v265 = vld [vmem:[#allocation7 + $0x668] sm:$0xff]
    %v266 = vld [vmem:[#allocation7 + $0x670] sm:$0xff]
    %v267 = vld [vmem:[#allocation7 + $0x678] sm:$0xff]
    %v268 = vld [vmem:[#allocation7 + $0x680] sm:$0xff]
    %v269 = vld [vmem:[#allocation7 + $0x688] sm:$0xff]
    %v270 = vld [vmem:[#allocation7 + $0x690] sm:$0xff]
    %v271 = vld [vmem:[#allocation7 + $0x698] sm:$0xff]
    %v272 = vld [vmem:[#allocation7 + $0x6a0] sm:$0xff]
    %v273 = vld [vmem:[#allocation7 + $0x6a8] sm:$0xff]
    %v274 = vld [vmem:[#allocation7 + $0x6b0] sm:$0xff]
    %v275 = vld [vmem:[#allocation7 + $0x6b8] sm:$0xff]
    %v276 = vld [vmem:[#allocation7 + $0x6c0] sm:$0xff]
    %v277 = vld [vmem:[#allocation7 + $0x6c8] sm:$0xff]
    %v278 = vld [vmem:[#allocation7 + $0x6d0] sm:$0xff]
    %v279 = vld [vmem:[#allocation7 + $0x6d8] sm:$0xff]
    %v280 = vld [vmem:[#allocation7 + $0x6e0] sm:$0xff]
    %v281 = vld [vmem:[#allocation7 + $0x6e8] sm:$0xff]
    %v282 = vld [vmem:[#allocation7 + $0x6f0] sm:$0xff]
    %v283 = vld [vmem:[#allocation7 + $0x6f8] sm:$0xff]
    %v284 = vld [vmem:[#allocation7 + $0x700] sm:$0xff]
    %v285 = vld [vmem:[#allocation7 + $0x708] sm:$0xff]
    %v286 = vld [vmem:[#allocation7 + $0x710] sm:$0xff]
    %v287 = vld [vmem:[#allocation7 + $0x718] sm:$0xff]
    %v288 = vld [vmem:[#allocation7 + $0x720] sm:$0xff]
    %v289 = vld [vmem:[#allocation7 + $0x728] sm:$0xff]
    %v290 = vld [vmem:[#allocation7 + $0x730] sm:$0xff]
    %v291 = vld [vmem:[#allocation7 + $0x738] sm:$0xff]
    %v292 = vld [vmem:[#allocation7 + $0x740] sm:$0xff]
    %v293 = vld [vmem:[#allocation7 + $0x748] sm:$0xff]
    %v294 = vld [vmem:[#allocation7 + $0x750] sm:$0xff]
    %v295 = vld [vmem:[#allocation7 + $0x758] sm:$0xff]
    %v296 = vld [vmem:[#allocation7 + $0x760] sm:$0xff]
    %v297 = vld [vmem:[#allocation7 + $0x768] sm:$0xff]
    %v298 = vld [vmem:[#allocation7 + $0x770] sm:$0xff]
    %v299 = vld [vmem:[#allocation7 + $0x778] sm:$0xff]
    %v300 = vld [vmem:[#allocation7 + $0x780] sm:$0xff]
    %v301 = vld [vmem:[#allocation7 + $0x788] sm:$0xff]
    %v302 = vld [vmem:[#allocation7 + $0x790] sm:$0xff]
    %v303 = vld [vmem:[#allocation7 + $0x798] sm:$0xff]
    %v304 = vld [vmem:[#allocation7 + $0x7a0] sm:$0xff]
    %v305 = vld [vmem:[#allocation7 + $0x7a8] sm:$0xff]
    %v306 = vld [vmem:[#allocation7 + $0x7b0] sm:$0xff]
    %v307 = vld [vmem:[#allocation7 + $0x7b8] sm:$0xff]
    %v308 = vld [vmem:[#allocation7 + $0x7c0] sm:$0xff]
    %v309 = vld [vmem:[#allocation7 + $0x7c8] sm:$0xff]
    %v310 = vld [vmem:[#allocation7 + $0x7d0] sm:$0xff]
    %v311 = vld [vmem:[#allocation7 + $0x7d8] sm:$0xff]
    %v312 = vld [vmem:[#allocation7 + $0x7e0] sm:$0xff]
    %v313 = vld [vmem:[#allocation7 + $0x7e8] sm:$0xff]
    %v314 = vld [vmem:[#allocation7 + $0x7f0] sm:$0xff]
    %v315 = vld [vmem:[#allocation7 + $0x7f8] sm:$0xff]
    %v317 = vperm.slane %v59, 0
    %v318 = vperm.slane %v59, 1
    %v319 = vperm.slane %v59, 2
    %v320 = vperm.slane %v59, 3
    %325 = vmatpush.msra.mxu0 %v120
    %326 = vmatpush.msra.mxu0 %v116
    %327 = vmatpush.msra.mxu0 %v112
    %328 = vmatpush.msra.mxu0 %v108
    %329 = vmatpush.msra.mxu0 %v104
    %330 = vmatpush.msra.mxu0 %v100
    %331 = vmatpush.msra.mxu0 %v96
    %332 = vmatpush.msra.mxu0 %v92
    %333 = vmatpush.msra.mxu0 %v88
    %334 = vmatpush.msra.mxu0 %v84
    %335 = vmatpush.msra.mxu0 %v80
    %336 = vmatpush.msra.mxu0 %v76
    %337 = vmatpush.msra.mxu0 %v72
    %338 = vmatpush.msra.mxu0 %v68
    %339 = vmatpush.msra.mxu0 %v64
    %340 = vmatpush.msra.mxu0 %v60
    %341 = vmatmul.f32.gmra.mxu0 %v317
    %v342 = vpop.f32.mrf.mxu0
    %v343 = vadd.f32 0.0, %v342
    %344 = vdwg.mxu0
    %345 = vmatpush.msra.mxu0 %v184
    %346 = vmatpush.msra.mxu0 %v180
    %347 = vmatpush.msra.mxu0 %v176
    %348 = vmatpush.msra.mxu0 %v172
    %349 = vmatpush.msra.mxu0 %v168
    %350 = vmatpush.msra.mxu0 %v164
    %351 = vmatpush.msra.mxu0 %v160
    %352 = vmatpush.msra.mxu0 %v156
    %353 = vmatpush.msra.mxu0 %v152
    %354 = vmatpush.msra.mxu0 %v148
    %355 = vmatpush.msra.mxu0 %v144
    %356 = vmatpush.msra.mxu0 %v140
    %357 = vmatpush.msra.mxu0 %v136
    %358 = vmatpush.msra.mxu0 %v132
    %359 = vmatpush.msra.mxu0 %v128
    %360 = vmatpush.msra.mxu0 %v124
    %361 = vmatmul.f32.gmra.mxu0 %v318
    %v362 = vpop.f32.mrf.mxu0
    %v363 = vadd.f32 %v343, %v362
    %364 = vdwg.mxu0
    %365 = vmatpush.msra.mxu0 %v248
    %366 = vmatpush.msra.mxu0 %v244
    %367 = vmatpush.msra.mxu0 %v240
    %368 = vmatpush.msra.mxu0 %v236
    %369 = vmatpush.msra.mxu0 %v232
    %370 = vmatpush.msra.mxu0 %v228
    %371 = vmatpush.msra.mxu0 %v224
    %372 = vmatpush.msra.mxu0 %v220
    %373 = vmatpush.msra.mxu0 %v216
    %374 = vmatpush.msra.mxu0 %v212
    %375 = vmatpush.msra.mxu0 %v208
    %376 = vmatpush.msra.mxu0 %v204
    %377 = vmatpush.msra.mxu0 %v200
    %378 = vmatpush.msra.mxu0 %v196
    %379 = vmatpush.msra.mxu0 %v192
    %380 = vmatpush.msra.mxu0 %v188
    %381 = vmatmul.f32.gmra.mxu0 %v319
    %v382 = vpop.f32.mrf.mxu0
    %v383 = vadd.f32 %v363, %v382
    %384 = vdwg.mxu0
    %385 = vmatpush.msra.mxu0 %v312
    %386 = vmatpush.msra.mxu0 %v308
    %387 = vmatpush.msra.mxu0 %v304
    %388 = vmatpush.msra.mxu0 %v300
    %389 = vmatpush.msra.mxu0 %v296
    %390 = vmatpush.msra.mxu0 %v292
    %391 = vmatpush.msra.mxu0 %v288
    %392 = vmatpush.msra.mxu0 %v284
    %393 = vmatpush.msra.mxu0 %v280
    %394 = vmatpush.msra.mxu0 %v276
    %395 = vmatpush.msra.mxu0 %v272
    %396 = vmatpush.msra.mxu0 %v268
    %397 = vmatpush.msra.mxu0 %v264
    %398 = vmatpush.msra.mxu0 %v260
    %399 = vmatpush.msra.mxu0 %v256
    %400 = vmatpush.msra.mxu0 %v252
    %401 = vmatmul.f32.gmra.mxu0 %v320
    %v402 = vpop.f32.mrf.mxu0
    %v403 = vadd.f32 %v383, %v402
    %404 = vdwg.mxu0
    %405 = vmatpush.msra.mxu0 %v121
    %406 = vmatpush.msra.mxu0 %v117
    %407 = vmatpush.msra.mxu0 %v113
    %408 = vmatpush.msra.mxu0 %v109
    %409 = vmatpush.msra.mxu0 %v105
    %410 = vmatpush.msra.mxu0 %v101
    %411 = vmatpush.msra.mxu0 %v97
    %412 = vmatpush.msra.mxu0 %v93
    %413 = vmatpush.msra.mxu0 %v89
    %414 = vmatpush.msra.mxu0 %v85
    %415 = vmatpush.msra.mxu0 %v81
    %416 = vmatpush.msra.mxu0 %v77
    %417 = vmatpush.msra.mxu0 %v73
    %418 = vmatpush.msra.mxu0 %v69
    %419 = vmatpush.msra.mxu0 %v65
    %420 = vmatpush.msra.mxu0 %v61
    %421 = vmatmul.f32.gmra.mxu0 %v317
    %v422 = vpop.f32.mrf.mxu0
    %v423 = vadd.f32 0.0, %v422
    %424 = vdwg.mxu0
    %425 = vmatpush.msra.mxu0 %v185
    %426 = vmatpush.msra.mxu0 %v181
    %427 = vmatpush.msra.mxu0 %v177
    %428 = vmatpush.msra.mxu0 %v173
    %429 = vmatpush.msra.mxu0 %v169
    %430 = vmatpush.msra.mxu0 %v165
    %431 = vmatpush.msra.mxu0 %v161
    %432 = vmatpush.msra.mxu0 %v157
    %433 = vmatpush.msra.mxu0 %v153
    %434 = vmatpush.msra.mxu0 %v149
    %435 = vmatpush.msra.mxu0 %v145
    %436 = vmatpush.msra.mxu0 %v141
    %437 = vmatpush.msra.mxu0 %v137
    %438 = vmatpush.msra.mxu0 %v133
    %439 = vmatpush.msra.mxu0 %v129
    %440 = vmatpush.msra.mxu0 %v125
    %441 = vmatmul.f32.gmra.mxu0 %v318
    %v442 = vpop.f32.mrf.mxu0
    %v443 = vadd.f32 %v423, %v442
    %444 = vdwg.mxu0
    %445 = vmatpush.msra.mxu0 %v249
    %446 = vmatpush.msra.mxu0 %v245
    %447 = vmatpush.msra.mxu0 %v241
    %448 = vmatpush.msra.mxu0 %v237
    %449 = vmatpush.msra.mxu0 %v233
    %450 = vmatpush.msra.mxu0 %v229
    %451 = vmatpush.msra.mxu0 %v225
    %452 = vmatpush.msra.mxu0 %v221
    %453 = vmatpush.msra.mxu0 %v217
    %454 = vmatpush.msra.mxu0 %v213
    %455 = vmatpush.msra.mxu0 %v209
    %456 = vmatpush.msra.mxu0 %v205
    %457 = vmatpush.msra.mxu0 %v201
    %458 = vmatpush.msra.mxu0 %v197
    %459 = vmatpush.msra.mxu0 %v193
    %460 = vmatpush.msra.mxu0 %v189
    %461 = vmatmul.f32.gmra.mxu0 %v319
    %v462 = vpop.f32.mrf.mxu0
    %v463 = vadd.f32 %v443, %v462
    %464 = vdwg.mxu0
    %465 = vmatpush.msra.mxu0 %v313
    %466 = vmatpush.msra.mxu0 %v309
    %467 = vmatpush.msra.mxu0 %v305
    %468 = vmatpush.msra.mxu0 %v301
    %469 = vmatpush.msra.mxu0 %v297
    %470 = vmatpush.msra.mxu0 %v293
    %471 = vmatpush.msra.mxu0 %v289
    %472 = vmatpush.msra.mxu0 %v285
    %473 = vmatpush.msra.mxu0 %v281
    %474 = vmatpush.msra.mxu0 %v277
    %475 = vmatpush.msra.mxu0 %v273
    %476 = vmatpush.msra.mxu0 %v269
    %477 = vmatpush.msra.mxu0 %v265
    %478 = vmatpush.msra.mxu0 %v261
    %479 = vmatpush.msra.mxu0 %v257
    %480 = vmatpush.msra.mxu0 %v253
    %481 = vmatmul.f32.gmra.mxu0 %v320
    %v482 = vpop.f32.mrf.mxu0
    %v483 = vadd.f32 %v463, %v482
    %484 = vdwg.mxu0
    %485 = vmatpush.msra.mxu0 %v122
    %486 = vmatpush.msra.mxu0 %v118
    %487 = vmatpush.msra.mxu0 %v114
    %488 = vmatpush.msra.mxu0 %v110
    %489 = vmatpush.msra.mxu0 %v106
    %490 = vmatpush.msra.mxu0 %v102
    %491 = vmatpush.msra.mxu0 %v98
    %492 = vmatpush.msra.mxu0 %v94
    %493 = vmatpush.msra.mxu0 %v90
    %494 = vmatpush.msra.mxu0 %v86
    %495 = vmatpush.msra.mxu0 %v82
    %496 = vmatpush.msra.mxu0 %v78
    %497 = vmatpush.msra.mxu0 %v74
    %498 = vmatpush.msra.mxu0 %v70
    %499 = vmatpush.msra.mxu0 %v66
    %500 = vmatpush.msra.mxu0 %v62
    %501 = vmatmul.f32.gmra.mxu0 %v317
    %v502 = vpop.f32.mrf.mxu0
    %v503 = vadd.f32 0.0, %v502
    %504 = vdwg.mxu0
    %505 = vmatpush.msra.mxu0 %v186
    %506 = vmatpush.msra.mxu0 %v182
    %507 = vmatpush.msra.mxu0 %v178
    %508 = vmatpush.msra.mxu0 %v174
    %509 = vmatpush.msra.mxu0 %v170
    %510 = vmatpush.msra.mxu0 %v166
    %511 = vmatpush.msra.mxu0 %v162
    %512 = vmatpush.msra.mxu0 %v158
    %513 = vmatpush.msra.mxu0 %v154
    %514 = vmatpush.msra.mxu0 %v150
    %515 = vmatpush.msra.mxu0 %v146
    %516 = vmatpush.msra.mxu0 %v142
    %517 = vmatpush.msra.mxu0 %v138
    %518 = vmatpush.msra.mxu0 %v134
    %519 = vmatpush.msra.mxu0 %v130
    %520 = vmatpush.msra.mxu0 %v126
    %521 = vmatmul.f32.gmra.mxu0 %v318
    %v522 = vpop.f32.mrf.mxu0
    %v523 = vadd.f32 %v503, %v522
    %524 = vdwg.mxu0
    %525 = vmatpush.msra.mxu0 %v250
    %526 = vmatpush.msra.mxu0 %v246
    %527 = vmatpush.msra.mxu0 %v242
    %528 = vmatpush.msra.mxu0 %v238
    %529 = vmatpush.msra.mxu0 %v234
    %530 = vmatpush.msra.mxu0 %v230
    %531 = vmatpush.msra.mxu0 %v226
    %532 = vmatpush.msra.mxu0 %v222
    %533 = vmatpush.msra.mxu0 %v218
    %534 = vmatpush.msra.mxu0 %v214
    %535 = vmatpush.msra.mxu0 %v210
    %536 = vmatpush.msra.mxu0 %v206
    %537 = vmatpush.msra.mxu0 %v202
    %538 = vmatpush.msra.mxu0 %v198
    %539 = vmatpush.msra.mxu0 %v194
    %540 = vmatpush.msra.mxu0 %v190
    %541 = vmatmul.f32.gmra.mxu0 %v319
    %v542 = vpop.f32.mrf.mxu0
    %v543 = vadd.f32 %v523, %v542
    %544 = vdwg.mxu0
    %545 = vmatpush.msra.mxu0 %v314
    %546 = vmatpush.msra.mxu0 %v310
    %547 = vmatpush.msra.mxu0 %v306
    %548 = vmatpush.msra.mxu0 %v302
    %549 = vmatpush.msra.mxu0 %v298
    %550 = vmatpush.msra.mxu0 %v294
    %551 = vmatpush.msra.mxu0 %v290
    %552 = vmatpush.msra.mxu0 %v286
    %553 = vmatpush.msra.mxu0 %v282
    %554 = vmatpush.msra.mxu0 %v278
    %555 = vmatpush.msra.mxu0 %v274
    %556 = vmatpush.msra.mxu0 %v270
    %557 = vmatpush.msra.mxu0 %v266
    %558 = vmatpush.msra.mxu0 %v262
    %559 = vmatpush.msra.mxu0 %v258
    %560 = vmatpush.msra.mxu0 %v254
    %561 = vmatmul.f32.gmra.mxu0 %v320
    %v562 = vpop.f32.mrf.mxu0
    %v563 = vadd.f32 %v543, %v562
    %564 = vdwg.mxu0
    %565 = vmatpush.msra.mxu0 %v123
    %566 = vmatpush.msra.mxu0 %v119
    %567 = vmatpush.msra.mxu0 %v115
    %568 = vmatpush.msra.mxu0 %v111
    %569 = vmatpush.msra.mxu0 %v107
    %570 = vmatpush.msra.mxu0 %v103
    %571 = vmatpush.msra.mxu0 %v99
    %572 = vmatpush.msra.mxu0 %v95
    %573 = vmatpush.msra.mxu0 %v91
    %574 = vmatpush.msra.mxu0 %v87
    %575 = vmatpush.msra.mxu0 %v83
    %576 = vmatpush.msra.mxu0 %v79
    %577 = vmatpush.msra.mxu0 %v75
    %578 = vmatpush.msra.mxu0 %v71
    %579 = vmatpush.msra.mxu0 %v67
    %580 = vmatpush.msra.mxu0 %v63
    %581 = vmatmul.f32.gmra.mxu0 %v317
    %v582 = vpop.f32.mrf.mxu0
    %v583 = vadd.f32 0.0, %v582
    %584 = vdwg.mxu0
    %585 = vmatpush.msra.mxu0 %v187
    %586 = vmatpush.msra.mxu0 %v183
    %587 = vmatpush.msra.mxu0 %v179
    %588 = vmatpush.msra.mxu0 %v175
    %589 = vmatpush.msra.mxu0 %v171
    %590 = vmatpush.msra.mxu0 %v167
    %591 = vmatpush.msra.mxu0 %v163
    %592 = vmatpush.msra.mxu0 %v159
    %593 = vmatpush.msra.mxu0 %v155
    %594 = vmatpush.msra.mxu0 %v151
    %595 = vmatpush.msra.mxu0 %v147
    %596 = vmatpush.msra.mxu0 %v143
    %597 = vmatpush.msra.mxu0 %v139
    %598 = vmatpush.msra.mxu0 %v135
    %599 = vmatpush.msra.mxu0 %v131
    %600 = vmatpush.msra.mxu0 %v127
    %601 = vmatmul.f32.gmra.mxu0 %v318
    %v602 = vpop.f32.mrf.mxu0
    %v603 = vadd.f32 %v583, %v602
    %604 = vdwg.mxu0
    %605 = vmatpush.msra.mxu0 %v251
    %606 = vmatpush.msra.mxu0 %v247
    %607 = vmatpush.msra.mxu0 %v243
    %608 = vmatpush.msra.mxu0 %v239
    %609 = vmatpush.msra.mxu0 %v235
    %610 = vmatpush.msra.mxu0 %v231
    %611 = vmatpush.msra.mxu0 %v227
    %612 = vmatpush.msra.mxu0 %v223
    %613 = vmatpush.msra.mxu0 %v219
    %614 = vmatpush.msra.mxu0 %v215
    %615 = vmatpush.msra.mxu0 %v211
    %616 = vmatpush.msra.mxu0 %v207
    %617 = vmatpush.msra.mxu0 %v203
    %618 = vmatpush.msra.mxu0 %v199
    %619 = vmatpush.msra.mxu0 %v195
    %620 = vmatpush.msra.mxu0 %v191
    %621 = vmatmul.f32.gmra.mxu0 %v319
    %v622 = vpop.f32.mrf.mxu0
    %v623 = vadd.f32 %v603, %v622
    %624 = vdwg.mxu0
    %625 = vmatpush.msra.mxu0 %v315
    %626 = vmatpush.msra.mxu0 %v311
    %627 = vmatpush.msra.mxu0 %v307
    %628 = vmatpush.msra.mxu0 %v303
    %629 = vmatpush.msra.mxu0 %v299
    %630 = vmatpush.msra.mxu0 %v295
    %631 = vmatpush.msra.mxu0 %v291
    %632 = vmatpush.msra.mxu0 %v287
    %633 = vmatpush.msra.mxu0 %v283
    %634 = vmatpush.msra.mxu0 %v279
    %635 = vmatpush.msra.mxu0 %v275
    %636 = vmatpush.msra.mxu0 %v271
    %637 = vmatpush.msra.mxu0 %v267
    %638 = vmatpush.msra.mxu0 %v263
    %639 = vmatpush.msra.mxu0 %v259
    %640 = vmatpush.msra.mxu0 %v255
    %641 = vmatmul.f32.gmra.mxu0 %v320
    %v642 = vpop.f32.mrf.mxu0
    %v643 = vadd.f32 %v623, %v642
    %644 = vdwg.mxu0
    %v645 = vrsqrt.pop %v403
    %v646 = vmul.f32 %v645, %v403
    %v647 = vmul.f32 %v646, %v645
    %v648 = vmul.f32 0.5, %v647
    %v649 = vsub.f32 1.5, %v648
    %v650 = vmul.f32 %v645, %v649
    %v651 = vmul.f32 %v403, %v650
    %vm652 = vcmp.eq.f32.partialorder %v403, inf
    %v653 = vsel %vm652, %v403, %v651
    %vm654 = vcmp.eq.f32.partialorder %v403, 0.0
    %v655 = vand.u32 %v403, 2147483648
    %v656 = vsel %vm654, %v655, %v653
    %v657 = vrsqrt.pop %v483
    %v658 = vmul.f32 %v657, %v483
    %v659 = vmul.f32 %v658, %v657
    %v660 = vmul.f32 0.5, %v659
    %v661 = vsub.f32 1.5, %v660
    %v662 = vmul.f32 %v657, %v661
    %v663 = vmul.f32 %v483, %v662
    %vm664 = vcmp.eq.f32.partialorder %v483, inf
    %v665 = vsel %vm664, %v483, %v663
    %vm666 = vcmp.eq.f32.partialorder %v483, 0.0
    %v667 = vand.u32 %v483, 2147483648
    %v668 = vsel %vm666, %v667, %v665
    %v669 = vrsqrt.pop %v563
    %v670 = vmul.f32 %v669, %v563
    %v671 = vmul.f32 %v670, %v669
    %v672 = vmul.f32 0.5, %v671
    %v673 = vsub.f32 1.5, %v672
    %v674 = vmul.f32 %v669, %v673
    %v675 = vmul.f32 %v563, %v674
    %vm676 = vcmp.eq.f32.partialorder %v563, inf
    %v677 = vsel %vm676, %v563, %v675
    %vm678 = vcmp.eq.f32.partialorder %v563, 0.0
    %v679 = vand.u32 %v563, 2147483648
    %v680 = vsel %vm678, %v679, %v677
    %v681 = vrsqrt.pop %v643
    %v682 = vmul.f32 %v681, %v643
    %v683 = vmul.f32 %v682, %v681
    %v684 = vmul.f32 0.5, %v683
    %v685 = vsub.f32 1.5, %v684
    %v686 = vmul.f32 %v681, %v685
    %v687 = vmul.f32 %v643, %v686
    %vm688 = vcmp.eq.f32.partialorder %v643, inf
    %v689 = vsel %vm688, %v643, %v687
    %vm690 = vcmp.eq.f32.partialorder %v643, 0.0
    %v691 = vand.u32 %v643, 2147483648
    %v692 = vsel %vm690, %v691, %v689
    %v693 = vmul.f32 %v656, 0.17677669
    %v694 = vmul.f32 %v668, 0.17677669
    %v695 = vmul.f32 %v680, 0.17677669
    %v696 = vmul.f32 %v692, 0.17677669
    %v697 = vadd.f32 %v693, 1e-08
    %v698 = vadd.f32 %v694, 1e-08
    %v699 = vadd.f32 %v695, 1e-08
    %v700 = vadd.f32 %v696, 1e-08
    %v701 = vrcp.pop %v697
    %v702 = vmul.f32 %v697, %v701
    %v703 = vsub.f32 1.0, %v702
    %v704 = vmul.f32 %v701, %v703
    %v705 = vadd.f32 %v701, %v704
    %vm706 = vweird.f32 %v697
    %vm707 = vweird.f32 %v701
    %vm708 = vmor %vm706, %vm707
    %v709 = vsel %vm708, %v701, %v705
    %v710 = vand.u32 2147483647, %v697
    %vm711 = vcmp.eq.f32.partialorder %v710, 8.507059e+37
    %v712 = vand.u32 %v697, 2147483648
    %v713 = vor.u32 1.1754944e-38, %v712
    %v714 = vsel %vm711, %v713, %v709
    %v715 = vrcp.pop %v698
    %v716 = vmul.f32 %v698, %v715
    %v717 = vsub.f32 1.0, %v716
    %v718 = vmul.f32 %v715, %v717
    %v719 = vadd.f32 %v715, %v718
    %vm720 = vweird.f32 %v698
    %vm721 = vweird.f32 %v715
    %vm722 = vmor %vm720, %vm721
    %v723 = vsel %vm722, %v715, %v719
    %v724 = vand.u32 2147483647, %v698
    %vm725 = vcmp.eq.f32.partialorder %v724, 8.507059e+37
    %v726 = vand.u32 %v698, 2147483648
    %v727 = vor.u32 1.1754944e-38, %v726
    %v728 = vsel %vm725, %v727, %v723
    %v729 = vrcp.pop %v699
    %v730 = vmul.f32 %v699, %v729
    %v731 = vsub.f32 1.0, %v730
    %v732 = vmul.f32 %v729, %v731
    %v733 = vadd.f32 %v729, %v732
    %vm734 = vweird.f32 %v699
    %vm735 = vweird.f32 %v729
    %vm736 = vmor %vm734, %vm735
    %v737 = vsel %vm736, %v729, %v733
    %v738 = vand.u32 2147483647, %v699
    %vm739 = vcmp.eq.f32.partialorder %v738, 8.507059e+37
    %v740 = vand.u32 %v699, 2147483648
    %v741 = vor.u32 1.1754944e-38, %v740
    %v742 = vsel %vm739, %v741, %v737
    %v743 = vrcp.pop %v700
    %v744 = vmul.f32 %v700, %v743
    %v745 = vsub.f32 1.0, %v744
    %v746 = vmul.f32 %v743, %v745
    %v747 = vadd.f32 %v743, %v746
    %vm748 = vweird.f32 %v700
    %vm749 = vweird.f32 %v743
    %vm750 = vmor %vm748, %vm749
    %v751 = vsel %vm750, %v743, %v747
    %v752 = vand.u32 2147483647, %v700
    %vm753 = vcmp.eq.f32.partialorder %v752, 8.507059e+37
    %v754 = vand.u32 %v700, 2147483648
    %v755 = vor.u32 1.1754944e-38, %v754
    %v756 = vsel %vm753, %v755, %v751
    %v761 = vrot.slane %v728, 7
    %v762 = vrot.slane %v742, 6
    %v763 = vrot.slane %v756, 5
    %vm764 = vcmask 1040384
    %v765 = vsel %vm764, %v714, %v761
    %vm766 = vcmask 1042434
    %v767 = vsel %vm766, %v762, %v763
    %vm768 = vcmask 1041408
    %v769 = vsel %vm768, %v765, %v767
    %v771 = vmul.f32 %v58, %v769
    %v772 = vld [vmem:[#allocation5] sm:$0xf]
    %v773 = vmul.f32 %v771, %v772
    %v774 = vlaneseq
    %vm775 = vcmp.ge.s32.totalorder %v774, 0
    %vm776 = vcmp.lt.s32.totalorder %v774, 512
    %vm777 = vmand %vm775, %vm776
    %778 = vst.msk [vmem:[#allocation8] sm:$0xf] %vm777, %v773
    // Predicated region
    $region26: #{tpu_custom_call.1} parent=1 // pred_check
      _
    $region27: #{tpu_custom_call.1} parent=1 // pred_check_branch
      %780 = sbr.rel (0) target = $region29
    $region28: #{tpu_custom_call.1} parent=1 // pred_region
      %782 = vsyncadd [#allocation4], 0
      %s784 = sshll.u32 [#allocation8], 4
      %s785 = int_to_ptr.vmem [resolvable:$true] %s784
      %s786 = sshll.u32 %s3, 4
      %s787 = int_to_ptr.hbm [resolvable:$true] %s786
      %789 = dma.vmem_to_hbm [thread:$0]  %s785, 64, %s787, [#allocation4]
    $region29: #{tpu_custom_call.1} parent=1 // pred_fallthru
      _
    // Predicated region
    $region30: #{tpu_custom_call.1} parent=1 // pred_check
      _
    $region31: #{tpu_custom_call.1} parent=1 // pred_check_branch
      %791 = sbr.rel (0) target = $region33
    $region32: #{tpu_custom_call.1} parent=1 // pred_region
      %793 = dma.done [#allocation4], 64
    $region33: #{tpu_custom_call.1} parent=1 // pred_fallthru
      _
    %794 = vsyncpa [#allocation3], 1
    %795 = vsyncpa [#allocation6], 1
    %796 = vsyncpa [#allocation4], 1

</llo_original>
